<compile_context>
chip_gen: v5e
topology: v5e:2x2
jax: 0.10.0
libtpu: 0.0.40
codegen_flags: <defaults>
</compile_context>

<pallas_src>
import functools

import jax
import jax.numpy as jnp
from jax.experimental import pallas as pl
from jax.experimental.pallas import tpu as pltpu

LANE = 128


def _lstm_fc_kernel(x_ref, wih_ref, whh_ref, b_ref, wfc_ref, bfc_ref, out_ref,
                    *, seq_len, batch, hidden):
    """Whole-model kernel: hoisted input projection + unrolled LSTM + fused FC.

    x_ref   : (T*B, C)      time-major input, flattened over (t, b)
    wih_ref : (C, 4H)       W_ih^T
    whh_ref : (H, 4H)       W_hh^T
    b_ref   : (1, 4H)       b_ih + b_hh
    wfc_ref : (H, NC_pad)   W_fc^T, zero-padded to a multiple of 128 lanes
    bfc_ref : (1, NC_pad)   b_fc, zero-padded
    out_ref : (B, NC_pad)
    """
    T, B, H = seq_len, batch, hidden

    # Hoisted, time-invariant input projection: ONE MXU matmul for all steps.
    # x_proj[t*B:(t+1)*B] holds x_t @ W_ih^T + (b_ih + b_hh) for timestep t.
    x_proj = (jnp.dot(x_ref[...], wih_ref[...],
                      preferred_element_type=jnp.float32)
              + b_ref[...])                                   # (T*B, 4H)

    whh = whh_ref[...]                                        # resident (H, 4H)

    # Recurrent state lives in vregs; (B, H) is tiny so register pressure is nil.
    h = jnp.zeros((B, H), jnp.float32)
    c = jnp.zeros((B, H), jnp.float32)

    # Fully unrolled recurrence (T is small and static) -> single basic block,
    # maximum LLO scheduler visibility, no per-step grid/loop overhead.
    for t in range(T):
        gates = (x_proj[t * B:(t + 1) * B, :]
                 + jnp.dot(h, whh, preferred_element_type=jnp.float32))
        # PyTorch gate order: i, f, g, o.
        i = jax.nn.sigmoid(gates[:, 0 * H:1 * H])
        f = jax.nn.sigmoid(gates[:, 1 * H:2 * H])
        g = jnp.tanh(gates[:, 2 * H:3 * H])
        o = jax.nn.sigmoid(gates[:, 3 * H:4 * H])
        c = f * c + i * g
        h = o * jnp.tanh(c)

    # Fused final Linear on the last hidden state; lane-dense (padded) output.
    out_ref[...] = (jnp.dot(h, wfc_ref[...],
                            preferred_element_type=jnp.float32)
                    + bfc_ref[...]).astype(out_ref.dtype)


def ecg_model_forward(x, params):
    """x: (B, C, T) float32 — same layout as the PyTorch module's input."""
    wih_t, whh_t, b, wfc_t, bfc = params
    B, C, T = x.shape
    H = whh_t.shape[0]
    NC = wfc_t.shape[1]
    NC_PAD = ((NC + LANE - 1) // LANE) * LANE

    # Zero-pad the FC weights/bias so the output store is full-lane (128-wide).
    wfc_pad = jnp.zeros((H, NC_PAD), jnp.float32).at[:, :NC].set(wfc_t)
    bfc_pad = jnp.zeros((1, NC_PAD), jnp.float32).at[:, :NC].set(bfc)

    # Time-major and flattened over (t, b) so the hoisted input projection is a
    # single 2-D matmul inside the kernel.
    x2d = jnp.transpose(x, (2, 0, 1)).reshape(T * B, C)

    kernel = functools.partial(_lstm_fc_kernel,
                               seq_len=T, batch=B, hidden=H)

    vmem = lambda: pl.BlockSpec(memory_space=pltpu.MemorySpace.VMEM)
    out_pad = pl.pallas_call(
        kernel,
        out_shape=jax.ShapeDtypeStruct((B, NC_PAD), jnp.float32),
        in_specs=[vmem(), vmem(), vmem(), vmem(), vmem(), vmem()],
        out_specs=vmem(),
    )(x2d, wih_t, whh_t, b, wfc_pad, bfc_pad)

    return out_pad[:, :NC]


def init_params(key, input_size, hidden_size, num_classes):
    """Deterministic init mimicking PyTorch's uniform(-1/sqrt(H), 1/sqrt(H))."""
    k1, k2, k3, k4, k5, k6 = jax.random.split(key, 6)
    k_lstm = 1.0 / jnp.sqrt(hidden_size)
    k_fc = 1.0 / jnp.sqrt(hidden_size)
    # PyTorch stores weight_ih: (4H, C), weight_hh: (4H, H); we pass transposes.
    wih_t = jax.random.uniform(k1, (input_size, 4 * hidden_size),
                               jnp.float32, -k_lstm, k_lstm)
    whh_t = jax.random.uniform(k2, (hidden_size, 4 * hidden_size),
                               jnp.float32, -k_lstm, k_lstm)
    b_ih = jax.random.uniform(k3, (1, 4 * hidden_size),
                              jnp.float32, -k_lstm, k_lstm)
    b_hh = jax.random.uniform(k4, (1, 4 * hidden_size),
                              jnp.float32, -k_lstm, k_lstm)
    wfc_t = jax.random.uniform(k5, (hidden_size, num_classes),
                               jnp.float32, -k_fc, k_fc)
    bfc = jax.random.uniform(k6, (1, num_classes),
                             jnp.float32, -k_fc, k_fc)
    return (wih_t, whh_t, b_ih + b_hh, wfc_t, bfc)


def ref_forward(x, params):
    """Pure-JAX reference (lax.scan LSTM) for correctness checking."""
    wih_t, whh_t, b, wfc_t, bfc = params
    B = x.shape[0]
    H = whh_t.shape[0]
    x_tm = jnp.transpose(x, (2, 0, 1))

    def step(carry, xt):
        h, c = carry
        gates = xt @ wih_t + h @ whh_t + b
        i = jax.nn.sigmoid(gates[:, 0 * H:1 * H])
        f = jax.nn.sigmoid(gates[:, 1 * H:2 * H])
        g = jnp.tanh(gates[:, 2 * H:3 * H])
        o = jax.nn.sigmoid(gates[:, 3 * H:4 * H])
        c = f * c + i * g
        h = o * jnp.tanh(c)
        return (h, c), None

    init = (jnp.zeros((B, H), jnp.float32), jnp.zeros((B, H), jnp.float32))
    (h, _), _ = jax.lax.scan(step, init, x_tm)
    return h @ wfc_t + bfc


if __name__ == "__main__":
    # Small shapes consistent with the module: input_size is fixed at 12 by the
    # model; module defaults hidden=64, num_classes=7; pick batch=2, seq=8.
    B, C, T = 2, 12, 8
    H, NC = 64, 7

    key = jax.random.PRNGKey(0)
    kx, kp = jax.random.split(key)
    x = jax.random.normal(kx, (B, C, T), jnp.float32)   # PyTorch-style (B, C, T)
    params = init_params(kp, C, H, NC)

    out = jax.block_until_ready(ecg_model_forward(x, params))
    ref = jax.block_until_ready(ref_forward(x, params))

    assert out.shape == (B, NC), out.shape
    assert jnp.allclose(out, ref, atol=1e-4, rtol=1e-4), (out, ref)
    print("KERNEL_OK")
</pallas_src>

<mosaic_0001>
module attributes {stable_mosaic.version = 11 : i64} {
  func.func @_lstm_fc_kernel(%arg0: memref<16x12xf32, #tpu.memory_space<vmem>>, %arg1: memref<12x256xf32, #tpu.memory_space<vmem>>, %arg2: memref<64x256xf32, #tpu.memory_space<vmem>>, %arg3: memref<1x256xf32, #tpu.memory_space<vmem>>, %arg4: memref<64x128xf32, #tpu.memory_space<vmem>>, %arg5: memref<1x128xf32, #tpu.memory_space<vmem>>, %arg6: memref<2x128xf32, #tpu.memory_space<vmem>>) attributes {dimension_semantics = [], scalar_prefetch = 0 : i64, scratch_operands = 0 : i64, tpu.core_type = #tpu.core_type<tc>} {
    %c0 = arith.constant 0 : index
    %c0_0 = arith.constant 0 : index
    %0 = vector.load %arg0[%c0, %c0_0] : memref<16x12xf32, #tpu.memory_space<vmem>>, vector<16x12xf32>
    %c0_1 = arith.constant 0 : index
    %c0_2 = arith.constant 0 : index
    %1 = vector.load %arg1[%c0_1, %c0_2] : memref<12x256xf32, #tpu.memory_space<vmem>>, vector<12x256xf32>
    %cst = arith.constant dense<0.000000e+00> : vector<16x256xf32>
    %2 = tpu.matmul %0, %1, %cst {dimension_numbers = #tpu.dot_dimension_numbers<[1], [0], [0], [1], [0, 0, 1, 1], [], []>} : vector<16x12xf32>, vector<12x256xf32>, vector<16x256xf32> -> vector<16x256xf32>
    %c0_3 = arith.constant 0 : index
    %c0_4 = arith.constant 0 : index
    %3 = vector.load %arg3[%c0_3, %c0_4] : memref<1x256xf32, #tpu.memory_space<vmem>>, vector<1x256xf32>
    %4 = vector.broadcast %3 : vector<1x256xf32> to vector<16x256xf32>
    %5 = arith.addf %2, %4 : vector<16x256xf32>
    %c0_5 = arith.constant 0 : index
    %c0_6 = arith.constant 0 : index
    %6 = vector.load %arg2[%c0_5, %c0_6] : memref<64x256xf32, #tpu.memory_space<vmem>>, vector<64x256xf32>
    %cst_7 = arith.constant 0.000000e+00 : f32
    %7 = vector.broadcast %cst_7 : f32 to vector<2x64xf32>
    %cst_8 = arith.constant 0.000000e+00 : f32
    %8 = vector.broadcast %cst_8 : f32 to vector<2x64xf32>
    %9 = vector.extract_strided_slice %5 {offsets = [0, 0], sizes = [2, 256], strides = [1, 1]} : vector<16x256xf32> to vector<2x256xf32>
    %cst_9 = arith.constant dense<0.000000e+00> : vector<2x256xf32>
    %10 = tpu.matmul %7, %6, %cst_9 {dimension_numbers = #tpu.dot_dimension_numbers<[1], [0], [0], [1], [0, 0, 1, 1], [], []>} : vector<2x64xf32>, vector<64x256xf32>, vector<2x256xf32> -> vector<2x256xf32>
    %11 = arith.addf %9, %10 : vector<2x256xf32>
    %12 = vector.extract_strided_slice %11 {offsets = [0, 0], sizes = [2, 64], strides = [1, 1]} : vector<2x256xf32> to vector<2x64xf32>
    %13 = arith.negf %12 : vector<2x64xf32>
    %14 = math.exp %13 : vector<2x64xf32>
    %cst_10 = arith.constant 1.000000e+00 : f32
    %15 = vector.broadcast %cst_10 : f32 to vector<2x64xf32>
    %16 = arith.addf %15, %14 : vector<2x64xf32>
    %17 = arith.divf %15, %16 : vector<2x64xf32>
    %18 = vector.extract_strided_slice %11 {offsets = [0, 64], sizes = [2, 64], strides = [1, 1]} : vector<2x256xf32> to vector<2x64xf32>
    %19 = arith.negf %18 : vector<2x64xf32>
    %20 = math.exp %19 : vector<2x64xf32>
    %cst_11 = arith.constant 1.000000e+00 : f32
    %21 = vector.broadcast %cst_11 : f32 to vector<2x64xf32>
    %22 = arith.addf %21, %20 : vector<2x64xf32>
    %23 = arith.divf %21, %22 : vector<2x64xf32>
    %24 = vector.extract_strided_slice %11 {offsets = [0, 128], sizes = [2, 64], strides = [1, 1]} : vector<2x256xf32> to vector<2x64xf32>
    %25 = math.tanh %24 : vector<2x64xf32>
    %26 = vector.extract_strided_slice %11 {offsets = [0, 192], sizes = [2, 64], strides = [1, 1]} : vector<2x256xf32> to vector<2x64xf32>
    %27 = arith.negf %26 : vector<2x64xf32>
    %28 = math.exp %27 : vector<2x64xf32>
    %cst_12 = arith.constant 1.000000e+00 : f32
    %29 = vector.broadcast %cst_12 : f32 to vector<2x64xf32>
    %30 = arith.addf %29, %28 : vector<2x64xf32>
    %31 = arith.divf %29, %30 : vector<2x64xf32>
    %32 = arith.mulf %23, %8 : vector<2x64xf32>
    %33 = arith.mulf %17, %25 : vector<2x64xf32>
    %34 = arith.addf %32, %33 : vector<2x64xf32>
    %35 = math.tanh %34 : vector<2x64xf32>
    %36 = arith.mulf %31, %35 : vector<2x64xf32>
    %37 = vector.extract_strided_slice %5 {offsets = [2, 0], sizes = [2, 256], strides = [1, 1]} : vector<16x256xf32> to vector<2x256xf32>
    %cst_13 = arith.constant dense<0.000000e+00> : vector<2x256xf32>
    %38 = tpu.matmul %36, %6, %cst_13 {dimension_numbers = #tpu.dot_dimension_numbers<[1], [0], [0], [1], [0, 0, 1, 1], [], []>} : vector<2x64xf32>, vector<64x256xf32>, vector<2x256xf32> -> vector<2x256xf32>
    %39 = arith.addf %37, %38 : vector<2x256xf32>
    %40 = vector.extract_strided_slice %39 {offsets = [0, 0], sizes = [2, 64], strides = [1, 1]} : vector<2x256xf32> to vector<2x64xf32>
    %41 = arith.negf %40 : vector<2x64xf32>
    %42 = math.exp %41 : vector<2x64xf32>
    %cst_14 = arith.constant 1.000000e+00 : f32
    %43 = vector.broadcast %cst_14 : f32 to vector<2x64xf32>
    %44 = arith.addf %43, %42 : vector<2x64xf32>
    %45 = arith.divf %43, %44 : vector<2x64xf32>
    %46 = vector.extract_strided_slice %39 {offsets = [0, 64], sizes = [2, 64], strides = [1, 1]} : vector<2x256xf32> to vector<2x64xf32>
    %47 = arith.negf %46 : vector<2x64xf32>
    %48 = math.exp %47 : vector<2x64xf32>
    %cst_15 = arith.constant 1.000000e+00 : f32
    %49 = vector.broadcast %cst_15 : f32 to vector<2x64xf32>
    %50 = arith.addf %49, %48 : vector<2x64xf32>
    %51 = arith.divf %49, %50 : vector<2x64xf32>
    %52 = vector.extract_strided_slice %39 {offsets = [0, 128], sizes = [2, 64], strides = [1, 1]} : vector<2x256xf32> to vector<2x64xf32>
    %53 = math.tanh %52 : vector<2x64xf32>
    %54 = vector.extract_strided_slice %39 {offsets = [0, 192], sizes = [2, 64], strides = [1, 1]} : vector<2x256xf32> to vector<2x64xf32>
    %55 = arith.negf %54 : vector<2x64xf32>
    %56 = math.exp %55 : vector<2x64xf32>
    %cst_16 = arith.constant 1.000000e+00 : f32
    %57 = vector.broadcast %cst_16 : f32 to vector<2x64xf32>
    %58 = arith.addf %57, %56 : vector<2x64xf32>
    %59 = arith.divf %57, %58 : vector<2x64xf32>
    %60 = arith.mulf %51, %34 : vector<2x64xf32>
    %61 = arith.mulf %45, %53 : vector<2x64xf32>
    %62 = arith.addf %60, %61 : vector<2x64xf32>
    %63 = math.tanh %62 : vector<2x64xf32>
    %64 = arith.mulf %59, %63 : vector<2x64xf32>
    %65 = vector.extract_strided_slice %5 {offsets = [4, 0], sizes = [2, 256], strides = [1, 1]} : vector<16x256xf32> to vector<2x256xf32>
    %cst_17 = arith.constant dense<0.000000e+00> : vector<2x256xf32>
    %66 = tpu.matmul %64, %6, %cst_17 {dimension_numbers = #tpu.dot_dimension_numbers<[1], [0], [0], [1], [0, 0, 1, 1], [], []>} : vector<2x64xf32>, vector<64x256xf32>, vector<2x256xf32> -> vector<2x256xf32>
    %67 = arith.addf %65, %66 : vector<2x256xf32>
    %68 = vector.extract_strided_slice %67 {offsets = [0, 0], sizes = [2, 64], strides = [1, 1]} : vector<2x256xf32> to vector<2x64xf32>
    %69 = arith.negf %68 : vector<2x64xf32>
    %70 = math.exp %69 : vector<2x64xf32>
    %cst_18 = arith.constant 1.000000e+00 : f32
    %71 = vector.broadcast %cst_18 : f32 to vector<2x64xf32>
    %72 = arith.addf %71, %70 : vector<2x64xf32>
    %73 = arith.divf %71, %72 : vector<2x64xf32>
    %74 = vector.extract_strided_slice %67 {offsets = [0, 64], sizes = [2, 64], strides = [1, 1]} : vector<2x256xf32> to vector<2x64xf32>
    %75 = arith.negf %74 : vector<2x64xf32>
    %76 = math.exp %75 : vector<2x64xf32>
    %cst_19 = arith.constant 1.000000e+00 : f32
    %77 = vector.broadcast %cst_19 : f32 to vector<2x64xf32>
    %78 = arith.addf %77, %76 : vector<2x64xf32>
    %79 = arith.divf %77, %78 : vector<2x64xf32>
    %80 = vector.extract_strided_slice %67 {offsets = [0, 128], sizes = [2, 64], strides = [1, 1]} : vector<2x256xf32> to vector<2x64xf32>
    %81 = math.tanh %80 : vector<2x64xf32>
    %82 = vector.extract_strided_slice %67 {offsets = [0, 192], sizes = [2, 64], strides = [1, 1]} : vector<2x256xf32> to vector<2x64xf32>
    %83 = arith.negf %82 : vector<2x64xf32>
    %84 = math.exp %83 : vector<2x64xf32>
    %cst_20 = arith.constant 1.000000e+00 : f32
    %85 = vector.broadcast %cst_20 : f32 to vector<2x64xf32>
    %86 = arith.addf %85, %84 : vector<2x64xf32>
    %87 = arith.divf %85, %86 : vector<2x64xf32>
    %88 = arith.mulf %79, %62 : vector<2x64xf32>
    %89 = arith.mulf %73, %81 : vector<2x64xf32>
    %90 = arith.addf %88, %89 : vector<2x64xf32>
    %91 = math.tanh %90 : vector<2x64xf32>
    %92 = arith.mulf %87, %91 : vector<2x64xf32>
    %93 = vector.extract_strided_slice %5 {offsets = [6, 0], sizes = [2, 256], strides = [1, 1]} : vector<16x256xf32> to vector<2x256xf32>
    %cst_21 = arith.constant dense<0.000000e+00> : vector<2x256xf32>
    %94 = tpu.matmul %92, %6, %cst_21 {dimension_numbers = #tpu.dot_dimension_numbers<[1], [0], [0], [1], [0, 0, 1, 1], [], []>} : vector<2x64xf32>, vector<64x256xf32>, vector<2x256xf32> -> vector<2x256xf32>
    %95 = arith.addf %93, %94 : vector<2x256xf32>
    %96 = vector.extract_strided_slice %95 {offsets = [0, 0], sizes = [2, 64], strides = [1, 1]} : vector<2x256xf32> to vector<2x64xf32>
    %97 = arith.negf %96 : vector<2x64xf32>
    %98 = math.exp %97 : vector<2x64xf32>
    %cst_22 = arith.constant 1.000000e+00 : f32
    %99 = vector.broadcast %cst_22 : f32 to vector<2x64xf32>
    %100 = arith.addf %99, %98 : vector<2x64xf32>
    %101 = arith.divf %99, %100 : vector<2x64xf32>
    %102 = vector.extract_strided_slice %95 {offsets = [0, 64], sizes = [2, 64], strides = [1, 1]} : vector<2x256xf32> to vector<2x64xf32>
    %103 = arith.negf %102 : vector<2x64xf32>
    %104 = math.exp %103 : vector<2x64xf32>
    %cst_23 = arith.constant 1.000000e+00 : f32
    %105 = vector.broadcast %cst_23 : f32 to vector<2x64xf32>
    %106 = arith.addf %105, %104 : vector<2x64xf32>
    %107 = arith.divf %105, %106 : vector<2x64xf32>
    %108 = vector.extract_strided_slice %95 {offsets = [0, 128], sizes = [2, 64], strides = [1, 1]} : vector<2x256xf32> to vector<2x64xf32>
    %109 = math.tanh %108 : vector<2x64xf32>
    %110 = vector.extract_strided_slice %95 {offsets = [0, 192], sizes = [2, 64], strides = [1, 1]} : vector<2x256xf32> to vector<2x64xf32>
    %111 = arith.negf %110 : vector<2x64xf32>
    %112 = math.exp %111 : vector<2x64xf32>
    %cst_24 = arith.constant 1.000000e+00 : f32
    %113 = vector.broadcast %cst_24 : f32 to vector<2x64xf32>
    %114 = arith.addf %113, %112 : vector<2x64xf32>
    %115 = arith.divf %113, %114 : vector<2x64xf32>
    %116 = arith.mulf %107, %90 : vector<2x64xf32>
    %117 = arith.mulf %101, %109 : vector<2x64xf32>
    %118 = arith.addf %116, %117 : vector<2x64xf32>
    %119 = math.tanh %118 : vector<2x64xf32>
    %120 = arith.mulf %115, %119 : vector<2x64xf32>
    %121 = vector.extract_strided_slice %5 {offsets = [8, 0], sizes = [2, 256], strides = [1, 1]} : vector<16x256xf32> to vector<2x256xf32>
    %cst_25 = arith.constant dense<0.000000e+00> : vector<2x256xf32>
    %122 = tpu.matmul %120, %6, %cst_25 {dimension_numbers = #tpu.dot_dimension_numbers<[1], [0], [0], [1], [0, 0, 1, 1], [], []>} : vector<2x64xf32>, vector<64x256xf32>, vector<2x256xf32> -> vector<2x256xf32>
    %123 = arith.addf %121, %122 : vector<2x256xf32>
    %124 = vector.extract_strided_slice %123 {offsets = [0, 0], sizes = [2, 64], strides = [1, 1]} : vector<2x256xf32> to vector<2x64xf32>
    %125 = arith.negf %124 : vector<2x64xf32>
    %126 = math.exp %125 : vector<2x64xf32>
    %cst_26 = arith.constant 1.000000e+00 : f32
    %127 = vector.broadcast %cst_26 : f32 to vector<2x64xf32>
    %128 = arith.addf %127, %126 : vector<2x64xf32>
    %129 = arith.divf %127, %128 : vector<2x64xf32>
    %130 = vector.extract_strided_slice %123 {offsets = [0, 64], sizes = [2, 64], strides = [1, 1]} : vector<2x256xf32> to vector<2x64xf32>
    %131 = arith.negf %130 : vector<2x64xf32>
    %132 = math.exp %131 : vector<2x64xf32>
    %cst_27 = arith.constant 1.000000e+00 : f32
    %133 = vector.broadcast %cst_27 : f32 to vector<2x64xf32>
    %134 = arith.addf %133, %132 : vector<2x64xf32>
    %135 = arith.divf %133, %134 : vector<2x64xf32>
    %136 = vector.extract_strided_slice %123 {offsets = [0, 128], sizes = [2, 64], strides = [1, 1]} : vector<2x256xf32> to vector<2x64xf32>
    %137 = math.tanh %136 : vector<2x64xf32>
    %138 = vector.extract_strided_slice %123 {offsets = [0, 192], sizes = [2, 64], strides = [1, 1]} : vector<2x256xf32> to vector<2x64xf32>
    %139 = arith.negf %138 : vector<2x64xf32>
    %140 = math.exp %139 : vector<2x64xf32>
    %cst_28 = arith.constant 1.000000e+00 : f32
    %141 = vector.broadcast %cst_28 : f32 to vector<2x64xf32>
    %142 = arith.addf %141, %140 : vector<2x64xf32>
    %143 = arith.divf %141, %142 : vector<2x64xf32>
    %144 = arith.mulf %135, %118 : vector<2x64xf32>
    %145 = arith.mulf %129, %137 : vector<2x64xf32>
    %146 = arith.addf %144, %145 : vector<2x64xf32>
    %147 = math.tanh %146 : vector<2x64xf32>
    %148 = arith.mulf %143, %147 : vector<2x64xf32>
    %149 = vector.extract_strided_slice %5 {offsets = [10, 0], sizes = [2, 256], strides = [1, 1]} : vector<16x256xf32> to vector<2x256xf32>
    %cst_29 = arith.constant dense<0.000000e+00> : vector<2x256xf32>
    %150 = tpu.matmul %148, %6, %cst_29 {dimension_numbers = #tpu.dot_dimension_numbers<[1], [0], [0], [1], [0, 0, 1, 1], [], []>} : vector<2x64xf32>, vector<64x256xf32>, vector<2x256xf32> -> vector<2x256xf32>
    %151 = arith.addf %149, %150 : vector<2x256xf32>
    %152 = vector.extract_strided_slice %151 {offsets = [0, 0], sizes = [2, 64], strides = [1, 1]} : vector<2x256xf32> to vector<2x64xf32>
    %153 = arith.negf %152 : vector<2x64xf32>
    %154 = math.exp %153 : vector<2x64xf32>
    %cst_30 = arith.constant 1.000000e+00 : f32
    %155 = vector.broadcast %cst_30 : f32 to vector<2x64xf32>
    %156 = arith.addf %155, %154 : vector<2x64xf32>
    %157 = arith.divf %155, %156 : vector<2x64xf32>
    %158 = vector.extract_strided_slice %151 {offsets = [0, 64], sizes = [2, 64], strides = [1, 1]} : vector<2x256xf32> to vector<2x64xf32>
    %159 = arith.negf %158 : vector<2x64xf32>
    %160 = math.exp %159 : vector<2x64xf32>
    %cst_31 = arith.constant 1.000000e+00 : f32
    %161 = vector.broadcast %cst_31 : f32 to vector<2x64xf32>
    %162 = arith.addf %161, %160 : vector<2x64xf32>
    %163 = arith.divf %161, %162 : vector<2x64xf32>
    %164 = vector.extract_strided_slice %151 {offsets = [0, 128], sizes = [2, 64], strides = [1, 1]} : vector<2x256xf32> to vector<2x64xf32>
    %165 = math.tanh %164 : vector<2x64xf32>
    %166 = vector.extract_strided_slice %151 {offsets = [0, 192], sizes = [2, 64], strides = [1, 1]} : vector<2x256xf32> to vector<2x64xf32>
    %167 = arith.negf %166 : vector<2x64xf32>
    %168 = math.exp %167 : vector<2x64xf32>
    %cst_32 = arith.constant 1.000000e+00 : f32
    %169 = vector.broadcast %cst_32 : f32 to vector<2x64xf32>
    %170 = arith.addf %169, %168 : vector<2x64xf32>
    %171 = arith.divf %169, %170 : vector<2x64xf32>
    %172 = arith.mulf %163, %146 : vector<2x64xf32>
    %173 = arith.mulf %157, %165 : vector<2x64xf32>
    %174 = arith.addf %172, %173 : vector<2x64xf32>
    %175 = math.tanh %174 : vector<2x64xf32>
    %176 = arith.mulf %171, %175 : vector<2x64xf32>
    %177 = vector.extract_strided_slice %5 {offsets = [12, 0], sizes = [2, 256], strides = [1, 1]} : vector<16x256xf32> to vector<2x256xf32>
    %cst_33 = arith.constant dense<0.000000e+00> : vector<2x256xf32>
    %178 = tpu.matmul %176, %6, %cst_33 {dimension_numbers = #tpu.dot_dimension_numbers<[1], [0], [0], [1], [0, 0, 1, 1], [], []>} : vector<2x64xf32>, vector<64x256xf32>, vector<2x256xf32> -> vector<2x256xf32>
    %179 = arith.addf %177, %178 : vector<2x256xf32>
    %180 = vector.extract_strided_slice %179 {offsets = [0, 0], sizes = [2, 64], strides = [1, 1]} : vector<2x256xf32> to vector<2x64xf32>
    %181 = arith.negf %180 : vector<2x64xf32>
    %182 = math.exp %181 : vector<2x64xf32>
    %cst_34 = arith.constant 1.000000e+00 : f32
    %183 = vector.broadcast %cst_34 : f32 to vector<2x64xf32>
    %184 = arith.addf %183, %182 : vector<2x64xf32>
    %185 = arith.divf %183, %184 : vector<2x64xf32>
    %186 = vector.extract_strided_slice %179 {offsets = [0, 64], sizes = [2, 64], strides = [1, 1]} : vector<2x256xf32> to vector<2x64xf32>
    %187 = arith.negf %186 : vector<2x64xf32>
    %188 = math.exp %187 : vector<2x64xf32>
    %cst_35 = arith.constant 1.000000e+00 : f32
    %189 = vector.broadcast %cst_35 : f32 to vector<2x64xf32>
    %190 = arith.addf %189, %188 : vector<2x64xf32>
    %191 = arith.divf %189, %190 : vector<2x64xf32>
    %192 = vector.extract_strided_slice %179 {offsets = [0, 128], sizes = [2, 64], strides = [1, 1]} : vector<2x256xf32> to vector<2x64xf32>
    %193 = math.tanh %192 : vector<2x64xf32>
    %194 = vector.extract_strided_slice %179 {offsets = [0, 192], sizes = [2, 64], strides = [1, 1]} : vector<2x256xf32> to vector<2x64xf32>
    %195 = arith.negf %194 : vector<2x64xf32>
    %196 = math.exp %195 : vector<2x64xf32>
    %cst_36 = arith.constant 1.000000e+00 : f32
    %197 = vector.broadcast %cst_36 : f32 to vector<2x64xf32>
    %198 = arith.addf %197, %196 : vector<2x64xf32>
    %199 = arith.divf %197, %198 : vector<2x64xf32>
    %200 = arith.mulf %191, %174 : vector<2x64xf32>
    %201 = arith.mulf %185, %193 : vector<2x64xf32>
    %202 = arith.addf %200, %201 : vector<2x64xf32>
    %203 = math.tanh %202 : vector<2x64xf32>
    %204 = arith.mulf %199, %203 : vector<2x64xf32>
    %205 = vector.extract_strided_slice %5 {offsets = [14, 0], sizes = [2, 256], strides = [1, 1]} : vector<16x256xf32> to vector<2x256xf32>
    %cst_37 = arith.constant dense<0.000000e+00> : vector<2x256xf32>
    %206 = tpu.matmul %204, %6, %cst_37 {dimension_numbers = #tpu.dot_dimension_numbers<[1], [0], [0], [1], [0, 0, 1, 1], [], []>} : vector<2x64xf32>, vector<64x256xf32>, vector<2x256xf32> -> vector<2x256xf32>
    %207 = arith.addf %205, %206 : vector<2x256xf32>
    %208 = vector.extract_strided_slice %207 {offsets = [0, 0], sizes = [2, 64], strides = [1, 1]} : vector<2x256xf32> to vector<2x64xf32>
    %209 = arith.negf %208 : vector<2x64xf32>
    %210 = math.exp %209 : vector<2x64xf32>
    %cst_38 = arith.constant 1.000000e+00 : f32
    %211 = vector.broadcast %cst_38 : f32 to vector<2x64xf32>
    %212 = arith.addf %211, %210 : vector<2x64xf32>
    %213 = arith.divf %211, %212 : vector<2x64xf32>
    %214 = vector.extract_strided_slice %207 {offsets = [0, 64], sizes = [2, 64], strides = [1, 1]} : vector<2x256xf32> to vector<2x64xf32>
    %215 = arith.negf %214 : vector<2x64xf32>
    %216 = math.exp %215 : vector<2x64xf32>
    %cst_39 = arith.constant 1.000000e+00 : f32
    %217 = vector.broadcast %cst_39 : f32 to vector<2x64xf32>
    %218 = arith.addf %217, %216 : vector<2x64xf32>
    %219 = arith.divf %217, %218 : vector<2x64xf32>
    %220 = vector.extract_strided_slice %207 {offsets = [0, 128], sizes = [2, 64], strides = [1, 1]} : vector<2x256xf32> to vector<2x64xf32>
    %221 = math.tanh %220 : vector<2x64xf32>
    %222 = vector.extract_strided_slice %207 {offsets = [0, 192], sizes = [2, 64], strides = [1, 1]} : vector<2x256xf32> to vector<2x64xf32>
    %223 = arith.negf %222 : vector<2x64xf32>
    %224 = math.exp %223 : vector<2x64xf32>
    %cst_40 = arith.constant 1.000000e+00 : f32
    %225 = vector.broadcast %cst_40 : f32 to vector<2x64xf32>
    %226 = arith.addf %225, %224 : vector<2x64xf32>
    %227 = arith.divf %225, %226 : vector<2x64xf32>
    %228 = arith.mulf %219, %202 : vector<2x64xf32>
    %229 = arith.mulf %213, %221 : vector<2x64xf32>
    %230 = arith.addf %228, %229 : vector<2x64xf32>
    %231 = math.tanh %230 : vector<2x64xf32>
    %232 = arith.mulf %227, %231 : vector<2x64xf32>
    %c0_41 = arith.constant 0 : index
    %c0_42 = arith.constant 0 : index
    %233 = vector.load %arg4[%c0_41, %c0_42] : memref<64x128xf32, #tpu.memory_space<vmem>>, vector<64x128xf32>
    %cst_43 = arith.constant dense<0.000000e+00> : vector<2x128xf32>
    %234 = tpu.matmul %232, %233, %cst_43 {dimension_numbers = #tpu.dot_dimension_numbers<[1], [0], [0], [1], [0, 0, 1, 1], [], []>} : vector<2x64xf32>, vector<64x128xf32>, vector<2x128xf32> -> vector<2x128xf32>
    %c0_44 = arith.constant 0 : index
    %c0_45 = arith.constant 0 : index
    %235 = vector.load %arg5[%c0_44, %c0_45] : memref<1x128xf32, #tpu.memory_space<vmem>>, vector<1x128xf32>
    %236 = vector.broadcast %235 : vector<1x128xf32> to vector<2x128xf32>
    %237 = arith.addf %234, %236 : vector<2x128xf32>
    %c0_46 = arith.constant 0 : index
    %c0_47 = arith.constant 0 : index
    %238 = vector.load %arg6[%c0_46, %c0_47] : memref<2x128xf32, #tpu.memory_space<vmem>>, vector<2x128xf32>
    tpu.vector_store %arg6[%c0_46, %c0_47], %237 {strides = array<i32>} : memref<2x128xf32, #tpu.memory_space<vmem>>, vector<2x128xf32>,
    return
  }
}

</mosaic_0001>

<llo_original>
// kernel: tpu_custom_call.1
$region0: #{tpu_custom_call.1}
  #allocation0 [shape = 'u32[]', space=smem, size = 0x4, offset = 0x4, fixed_abs, tag = 'smem constant byte address 0x4 - core index']
  #allocation1 [shape = 'u32[72,128]{1,0:T(1,128)}', space=vmem, size = 0x9000, scoped, tag = 'internal scratch']
  %s0 = inlined_call_operand.hbm [shape: f32[16,12], index: 0, kind: input, shape index: {}]
  %s1 = inlined_call_operand.hbm [shape: f32[12,256], index: 1, kind: input, shape index: {}]
  %s2 = inlined_call_operand.hbm [shape: f32[64,256], index: 2, kind: input, shape index: {}]
  %s3 = inlined_call_operand.vmem [shape: f32[1,256], index: 3, kind: input, shape index: {}]
  %s4 = inlined_call_operand.hbm [shape: f32[64,128], index: 4, kind: input, shape index: {}]
  %s5 = inlined_call_operand.vmem [shape: f32[1,128], index: 5, kind: input, shape index: {}]
  %s6 = inlined_call_operand.hbm [shape: f32[2,128], index: 6, kind: output, shape index: {}]
  %s7 = sld [smem:[#allocation0]]
  $region50: #{tpu_custom_call.1} parent=0
    _
  %s9 = ssub.s32 1, %s7
  %s10 = scalar_select 0, %s9, %s7
  $region1: #{tpu_custom_call.1} parent=0
    #allocation2 [shape = 'u8[8192]{0}', space=vmem, size = 0x2000, scoped, tag = 'input window, operand 0, single buffered']
    #allocation3 [shape = 's32[1]{0}', space=sflag, size = 0x4, scoped, tag = 'scoped memory for tpu_custom_call.1']
    #allocation4 [shape = 's32[1]{0}', space=sflag, size = 0x4, scoped, tag = 'scoped memory for tpu_custom_call.1']
    #allocation5 [shape = 'u8[16384]{0}', space=vmem, size = 0x4000, scoped, tag = 'input window, operand 1, single buffered']
    #allocation6 [shape = 's32[1]{0}', space=sflag, size = 0x4, scoped, tag = 'scoped memory for tpu_custom_call.1']
    #allocation7 [shape = 'u8[65536]{0}', space=vmem, size = 0x10000, scoped, tag = 'input window, operand 2, single buffered']
    #allocation8 [shape = 'u8[32768]{0}', space=vmem, size = 0x8000, scoped, tag = 'input window, operand 4, single buffered']
    #allocation9 [shape = 's32[1]{0}', space=sflag, size = 0x4, scoped, tag = 'scoped memory for tpu_custom_call.1']
    #allocation10 [shape = 'u8[1024]{0}', space=vmem, size = 0x400, scoped, tag = 'output window, operand 0, single buffered']
    %11 = vsyncpa [#allocation3], 0
    %12 = vsyncpa [#allocation6], 0
    %13 = vsyncpa [#allocation9], 0
    %14 = vsyncpa [#allocation4], 0
    // Predicated region
    $region2: #{tpu_custom_call.1} parent=1 // pred_check
      _
    $region3: #{tpu_custom_call.1} parent=1 // pred_check_branch
      %16 = sbr.rel (0) target = $region5
    $region4: #{tpu_custom_call.1} parent=1 // pred_region
      %18 = vsyncadd [#allocation3], 0
      %s19 = sshll.u32 %s0, 4
      %s20 = int_to_ptr.hbm [resolvable:$true] %s19
      %s21 = sshll.u32 [#allocation2], 4
      %s22 = int_to_ptr.vmem [resolvable:$true] %s21
      %27 = dma.hbm_to_vmem [thread:$0]  %s20, 256, %s22, [#allocation3], 128, 128, 8
    $region5: #{tpu_custom_call.1} parent=1 // pred_fallthru
      _
    // Predicated region
    $region6: #{tpu_custom_call.1} parent=1 // pred_check
      _
    $region7: #{tpu_custom_call.1} parent=1 // pred_check_branch
      %29 = sbr.rel (0) target = $region9
    $region8: #{tpu_custom_call.1} parent=1 // pred_region
      %31 = vsyncadd [#allocation6], 0
      %s32 = sshll.u32 %s1, 4
      %s33 = int_to_ptr.hbm [resolvable:$true] %s32
      %s34 = sshll.u32 [#allocation5], 4
      %s35 = int_to_ptr.vmem [resolvable:$true] %s34
      %40 = dma.hbm_to_vmem [thread:$0]  %s33, 512, %s35, [#allocation6], 256, 256, 16
    $region9: #{tpu_custom_call.1} parent=1 // pred_fallthru
      _
    // Predicated region
    $region10: #{tpu_custom_call.1} parent=1 // pred_check
      _
    $region11: #{tpu_custom_call.1} parent=1 // pred_check_branch
      %42 = sbr.rel (0) target = $region13
    $region12: #{tpu_custom_call.1} parent=1 // pred_region
      %44 = vsyncadd [#allocation6], 0
      %s45 = sshll.u32 %s2, 4
      %s46 = int_to_ptr.hbm [resolvable:$true] %s45
      %s47 = sshll.u32 [#allocation7], 4
      %s48 = int_to_ptr.vmem [resolvable:$true] %s47
      %53 = dma.hbm_to_vmem [thread:$0]  %s46, 2048, %s48, [#allocation6], 256, 256, 16
    $region13: #{tpu_custom_call.1} parent=1 // pred_fallthru
      _
    // Predicated region
    $region14: #{tpu_custom_call.1} parent=1 // pred_check
      _
    $region15: #{tpu_custom_call.1} parent=1 // pred_check_branch
      %55 = sbr.rel (0) target = $region17
    $region16: #{tpu_custom_call.1} parent=1 // pred_region
      _
    $region17: #{tpu_custom_call.1} parent=1 // pred_fallthru
      _
    // Predicated region
    $region18: #{tpu_custom_call.1} parent=1 // pred_check
      _
    $region19: #{tpu_custom_call.1} parent=1 // pred_check_branch
      %57 = sbr.rel (0) target = $region21
    $region20: #{tpu_custom_call.1} parent=1 // pred_region
      %59 = vsyncadd [#allocation9], 0
      %s60 = sshll.u32 %s4, 4
      %s61 = int_to_ptr.hbm [resolvable:$true] %s60
      %s62 = sshll.u32 [#allocation8], 4
      %s63 = int_to_ptr.vmem [resolvable:$true] %s62
      %68 = dma.hbm_to_vmem [thread:$0]  %s61, 1024, %s63, [#allocation9], 128, 128, 8
    $region21: #{tpu_custom_call.1} parent=1 // pred_fallthru
      _
    // Predicated region
    $region22: #{tpu_custom_call.1} parent=1 // pred_check
      _
    $region23: #{tpu_custom_call.1} parent=1 // pred_check_branch
      %70 = sbr.rel (0) target = $region25
    $region24: #{tpu_custom_call.1} parent=1 // pred_region
      _
    $region25: #{tpu_custom_call.1} parent=1 // pred_fallthru
      _
    // Predicated region
    $region26: #{tpu_custom_call.1} parent=1 // pred_check
      _
    $region27: #{tpu_custom_call.1} parent=1 // pred_check_branch
      %72 = sbr.rel (0) target = $region29
    $region28: #{tpu_custom_call.1} parent=1 // pred_region
      %74 = dma.done [#allocation3], 256
    $region29: #{tpu_custom_call.1} parent=1 // pred_fallthru
      _
    // Predicated region
    $region30: #{tpu_custom_call.1} parent=1 // pred_check
      _
    $region31: #{tpu_custom_call.1} parent=1 // pred_check_branch
      %76 = sbr.rel (0) target = $region33
    $region32: #{tpu_custom_call.1} parent=1 // pred_region
      %78 = dma.done [#allocation6], 512
    $region33: #{tpu_custom_call.1} parent=1 // pred_fallthru
      _
    // Predicated region
    $region34: #{tpu_custom_call.1} parent=1 // pred_check
      _
    $region35: #{tpu_custom_call.1} parent=1 // pred_check_branch
      %80 = sbr.rel (0) target = $region37
    $region36: #{tpu_custom_call.1} parent=1 // pred_region
      %82 = dma.done [#allocation6], 2048
    $region37: #{tpu_custom_call.1} parent=1 // pred_fallthru
      _
    // Predicated region
    $region38: #{tpu_custom_call.1} parent=1 // pred_check
      _
    $region39: #{tpu_custom_call.1} parent=1 // pred_check_branch
      %84 = sbr.rel (0) target = $region41
    $region40: #{tpu_custom_call.1} parent=1 // pred_region
      %86 = dma.done [#allocation9], 1024
    $region41: #{tpu_custom_call.1} parent=1 // pred_fallthru
      _
    %v87 = vld [vmem:[#allocation2] sm:$0xff]
    %v88 = vld [vmem:[#allocation2 + $0x8] sm:$0xff]
    %v89 = vld [vmem:[#allocation5] sm:$0xff]
    %v90 = vld [vmem:[#allocation5 + $0x8] sm:$0xff]
    %v91 = vld [vmem:[#allocation5 + $0x10] sm:$0xf]
    %v92 = vld [vmem:[#allocation5 + $0x18] sm:$0xf]
    %v93 = vld [vmem:[%s3] sm:$0x3]
    %v95 = vperm.slane %v93, 0
    %v96 = vperm.slane %v93, 1
    %vm99 = vcmask 97280
    %v101 = vsel %vm99, %v87, 0
    %v104 = vsel %vm99, %v88, 0
    %vm106 = vcmask 1043456
    %v108 = vsel %vm106, %v91, 0
    %v111 = vsel %vm106, %v92, 0
    %113 = vmatpush.msra.mxu0 0.0
    %114 = vmatpush.msra.mxu0 0.0
    %115 = vmatpush.msra.mxu0 0.0
    %116 = vmatpush.msra.mxu0 0.0
    %117 = vmatpush.msra.mxu0 0.0
    %118 = vmatpush.msra.mxu0 0.0
    %119 = vmatpush.msra.mxu0 0.0
    %120 = vmatpush.msra.mxu0 0.0
    %121 = vmatpush.msra.mxu0 0.0
    %122 = vmatpush.msra.mxu0 0.0
    %123 = vmatpush.msra.mxu0 0.0
    %124 = vmatpush.msra.mxu0 0.0
    %125 = vmatpush.msra.mxu0 0.0
    %126 = vmatpush.msra.mxu0 0.0
    %127 = vmatpush.msra.mxu0 %v108
    %128 = vmatpush.msra.mxu0 %v89
    %129 = vmatmul.f32.gmra.mxu0 %v101
    %v130 = vpop.f32.mrf.mxu0
    %v131 = vadd.f32 %v95, %v130
    %132 = vmatmul.f32.gmra.mxu0 %v104
    %v133 = vpop.f32.mrf.mxu0
    %v134 = vadd.f32 %v95, %v133
    %135 = vdwg.mxu0
    %136 = vmatpush.msra.mxu0 0.0
    %137 = vmatpush.msra.mxu0 0.0
    %138 = vmatpush.msra.mxu0 0.0
    %139 = vmatpush.msra.mxu0 0.0
    %140 = vmatpush.msra.mxu0 0.0
    %141 = vmatpush.msra.mxu0 0.0
    %142 = vmatpush.msra.mxu0 0.0
    %143 = vmatpush.msra.mxu0 0.0
    %144 = vmatpush.msra.mxu0 0.0
    %145 = vmatpush.msra.mxu0 0.0
    %146 = vmatpush.msra.mxu0 0.0
    %147 = vmatpush.msra.mxu0 0.0
    %148 = vmatpush.msra.mxu0 0.0
    %149 = vmatpush.msra.mxu0 0.0
    %150 = vmatpush.msra.mxu0 %v111
    %151 = vmatpush.msra.mxu0 %v90
    %152 = vmatmul.f32.gmra.mxu0 %v101
    %v153 = vpop.f32.mrf.mxu0
    %v154 = vadd.f32 %v96, %v153
    %155 = vmatmul.f32.gmra.mxu0 %v104
    %v156 = vpop.f32.mrf.mxu0
    %v157 = vadd.f32 %v96, %v156
    %158 = vdwg.mxu0
    %v159 = vld [vmem:[#allocation7] sm:$0xff]
    %v160 = vld [vmem:[#allocation7 + $0x8] sm:$0xff]
    %v161 = vld [vmem:[#allocation7 + $0x10] sm:$0xff]
    %v162 = vld [vmem:[#allocation7 + $0x18] sm:$0xff]
    %v163 = vld [vmem:[#allocation7 + $0x20] sm:$0xff]
    %v164 = vld [vmem:[#allocation7 + $0x28] sm:$0xff]
    %v165 = vld [vmem:[#allocation7 + $0x30] sm:$0xff]
    %v166 = vld [vmem:[#allocation7 + $0x38] sm:$0xff]
    %v167 = vld [vmem:[#allocation7 + $0x40] sm:$0xff]
    %v168 = vld [vmem:[#allocation7 + $0x48] sm:$0xff]
    %v169 = vld [vmem:[#allocation7 + $0x50] sm:$0xff]
    %v170 = vld [vmem:[#allocation7 + $0x58] sm:$0xff]
    %v171 = vld [vmem:[#allocation7 + $0x60] sm:$0xff]
    %v172 = vld [vmem:[#allocation7 + $0x68] sm:$0xff]
    %v173 = vld [vmem:[#allocation7 + $0x70] sm:$0xff]
    %v174 = vld [vmem:[#allocation7 + $0x78] sm:$0xff]
    %vm175 = vcmask 523264
    %v177 = vsel %vm175, 0.0, 0
    %179 = vmatpush.msra.mxu0 0.0
    %180 = vmatpush.msra.mxu0 0.0
    %181 = vmatpush.msra.mxu0 0.0
    %182 = vmatpush.msra.mxu0 0.0
    %183 = vmatpush.msra.mxu0 0.0
    %184 = vmatpush.msra.mxu0 0.0
    %185 = vmatpush.msra.mxu0 0.0
    %186 = vmatpush.msra.mxu0 0.0
    %187 = vmatpush.msra.mxu0 %v173
    %188 = vmatpush.msra.mxu0 %v171
    %189 = vmatpush.msra.mxu0 %v169
    %190 = vmatpush.msra.mxu0 %v167
    %191 = vmatpush.msra.mxu0 %v165
    %192 = vmatpush.msra.mxu0 %v163
    %193 = vmatpush.msra.mxu0 %v161
    %194 = vmatpush.msra.mxu0 %v159
    %195 = vmatmul.f32.gmra.mxu0 %v177
    %v196 = vpop.f32.mrf.mxu0
    %v197 = vadd.f32 0.0, %v196
    %198 = vdwg.mxu0
    %199 = vmatpush.msra.mxu0 0.0
    %200 = vmatpush.msra.mxu0 0.0
    %201 = vmatpush.msra.mxu0 0.0
    %202 = vmatpush.msra.mxu0 0.0
    %203 = vmatpush.msra.mxu0 0.0
    %204 = vmatpush.msra.mxu0 0.0
    %205 = vmatpush.msra.mxu0 0.0
    %206 = vmatpush.msra.mxu0 0.0
    %207 = vmatpush.msra.mxu0 %v174
    %208 = vmatpush.msra.mxu0 %v172
    %209 = vmatpush.msra.mxu0 %v170
    %210 = vmatpush.msra.mxu0 %v168
    %211 = vmatpush.msra.mxu0 %v166
    %212 = vmatpush.msra.mxu0 %v164
    %213 = vmatpush.msra.mxu0 %v162
    %214 = vmatpush.msra.mxu0 %v160
    %215 = vmatmul.f32.gmra.mxu0 %v177
    %v216 = vpop.f32.mrf.mxu0
    %v217 = vadd.f32 0.0, %v216
    %218 = vdwg.mxu0
    %v219 = vadd.f32 %v131, %v197
    %v220 = vadd.f32 %v154, %v217
    %v221 = vxor.u32 %v219, 2147483648
    %v222 = vmul.f32 %v221, 1.442695
    %v223 = vpow.pop %v222
    %v224 = vadd.f32 %v223, 1.0
    %v225 = vrcp.pop %v224
    %v226 = vmul.f32 %v224, %v225
    %v227 = vsub.f32 1.0, %v226
    %v228 = vmul.f32 %v225, %v227
    %v229 = vadd.f32 %v225, %v228
    %vm230 = vweird.f32 %v224
    %vm231 = vweird.f32 %v225
    %vm232 = vmor %vm230, %vm231
    %v233 = vsel %vm232, %v225, %v229
    %v234 = vand.u32 2147483647, %v224
    %vm235 = vcmp.eq.f32.partialorder %v234, 8.507059e+37
    %v236 = vand.u32 %v224, 2147483648
    %v237 = vor.u32 1.1754944e-38, %v236
    %v238 = vsel %vm235, %v237, %v233
    %v239 = vmul.f32 1.0, %v238
    %v240 = vtanh.pop %v220
    %v241 = vxor.u32 %v220, 2147483648
    %v242 = vmul.f32 %v241, 1.442695
    %v243 = vpow.pop %v242
    %v244 = vadd.f32 %v243, 1.0
    %v245 = vrcp.pop %v244
    %v246 = vmul.f32 %v244, %v245
    %v247 = vsub.f32 1.0, %v246
    %v248 = vmul.f32 %v245, %v247
    %v249 = vadd.f32 %v245, %v248
    %vm250 = vweird.f32 %v244
    %vm251 = vweird.f32 %v245
    %vm252 = vmor %vm250, %vm251
    %v253 = vsel %vm252, %v245, %v249
    %v254 = vand.u32 2147483647, %v244
    %vm255 = vcmp.eq.f32.partialorder %v254, 8.507059e+37
    %v256 = vand.u32 %v244, 2147483648
    %v257 = vor.u32 1.1754944e-38, %v256
    %v258 = vsel %vm255, %v257, %v253
    %v259 = vmul.f32 1.0, %v258
    %v260 = vmul.f32 %v239, 0.0
    %v261 = vmul.f32 %v239, %v240
    %263 = vrot.lane.b32.xlu0 %v261, 64
    %v264 = vpop.permute.xlu0 %263
    %v266 = vadd.f32 %v260, %v264
    %v267 = vtanh.pop %v266
    %v268 = vmul.f32 %v259, %v267
    %270 = vrot.lane.b32.xlu0 %v268, 64
    %v271 = vpop.permute.xlu0 %270
    %v272 = vsel %vm175, %v271, 0
    %274 = vmatpush.msra.mxu0 0.0
    %275 = vmatpush.msra.mxu0 0.0
    %276 = vmatpush.msra.mxu0 0.0
    %277 = vmatpush.msra.mxu0 0.0
    %278 = vmatpush.msra.mxu0 0.0
    %279 = vmatpush.msra.mxu0 0.0
    %280 = vmatpush.msra.mxu0 0.0
    %281 = vmatpush.msra.mxu0 0.0
    %282 = vmatpush.msra.mxu0 %v173
    %283 = vmatpush.msra.mxu0 %v171
    %284 = vmatpush.msra.mxu0 %v169
    %285 = vmatpush.msra.mxu0 %v167
    %286 = vmatpush.msra.mxu0 %v165
    %287 = vmatpush.msra.mxu0 %v163
    %288 = vmatpush.msra.mxu0 %v161
    %289 = vmatpush.msra.mxu0 %v159
    %290 = vmatmul.f32.gmra.mxu0 %v272
    %v291 = vpop.f32.mrf.mxu0
    %v292 = vadd.f32 0.0, %v291
    %293 = vdwg.mxu0
    %294 = vmatpush.msra.mxu0 0.0
    %295 = vmatpush.msra.mxu0 0.0
    %296 = vmatpush.msra.mxu0 0.0
    %297 = vmatpush.msra.mxu0 0.0
    %298 = vmatpush.msra.mxu0 0.0
    %299 = vmatpush.msra.mxu0 0.0
    %300 = vmatpush.msra.mxu0 0.0
    %301 = vmatpush.msra.mxu0 0.0
    %302 = vmatpush.msra.mxu0 %v174
    %303 = vmatpush.msra.mxu0 %v172
    %304 = vmatpush.msra.mxu0 %v170
    %305 = vmatpush.msra.mxu0 %v168
    %306 = vmatpush.msra.mxu0 %v166
    %307 = vmatpush.msra.mxu0 %v164
    %308 = vmatpush.msra.mxu0 %v162
    %309 = vmatpush.msra.mxu0 %v160
    %310 = vmatmul.f32.gmra.mxu0 %v272
    %v311 = vpop.f32.mrf.mxu0
    %v312 = vadd.f32 0.0, %v311
    %313 = vdwg.mxu0
    %v316 = vrot.slane %v292, 6
    %v317 = vrot.slane %v312, 6
    %v320 = vadd.f32 %v131, %v316
    %v321 = vadd.f32 %v154, %v317
    %v322 = vxor.u32 %v320, 2147483648
    %v323 = vmul.f32 %v322, 1.442695
    %v324 = vpow.pop %v323
    %v325 = vadd.f32 %v324, 1.0
    %v326 = vrcp.pop %v325
    %v327 = vmul.f32 %v325, %v326
    %v328 = vsub.f32 1.0, %v327
    %v329 = vmul.f32 %v326, %v328
    %v330 = vadd.f32 %v326, %v329
    %vm331 = vweird.f32 %v325
    %vm332 = vweird.f32 %v326
    %vm333 = vmor %vm331, %vm332
    %v334 = vsel %vm333, %v326, %v330
    %v335 = vand.u32 2147483647, %v325
    %vm336 = vcmp.eq.f32.partialorder %v335, 8.507059e+37
    %v337 = vand.u32 %v325, 2147483648
    %v338 = vor.u32 1.1754944e-38, %v337
    %v339 = vsel %vm336, %v338, %v334
    %v340 = vmul.f32 1.0, %v339
    %v341 = vtanh.pop %v321
    %v342 = vxor.u32 %v321, 2147483648
    %v343 = vmul.f32 %v342, 1.442695
    %v344 = vpow.pop %v343
    %v345 = vadd.f32 %v344, 1.0
    %v346 = vrcp.pop %v345
    %v347 = vmul.f32 %v345, %v346
    %v348 = vsub.f32 1.0, %v347
    %v349 = vmul.f32 %v346, %v348
    %v350 = vadd.f32 %v346, %v349
    %vm351 = vweird.f32 %v345
    %vm352 = vweird.f32 %v346
    %vm353 = vmor %vm351, %vm352
    %v354 = vsel %vm353, %v346, %v350
    %v355 = vand.u32 2147483647, %v345
    %vm356 = vcmp.eq.f32.partialorder %v355, 8.507059e+37
    %v357 = vand.u32 %v345, 2147483648
    %v358 = vor.u32 1.1754944e-38, %v357
    %v359 = vsel %vm356, %v358, %v354
    %v360 = vmul.f32 1.0, %v359
    %v362 = vrot.slane %v266, 6
    %v364 = vmul.f32 %v340, %v362
    %v365 = vmul.f32 %v340, %v341
    %367 = vrot.lane.b32.xlu0 %v365, 64
    %v368 = vpop.permute.xlu0 %367
    %v370 = vadd.f32 %v364, %v368
    %v371 = vtanh.pop %v370
    %v372 = vmul.f32 %v360, %v371
    %v374 = vrot.slane %v372, 2
    %375 = vrot.lane.b32.xlu0 %v374, 64
    %v376 = vpop.permute.xlu0 %375
    %v377 = vsel %vm175, %v376, 0
    %379 = vmatpush.msra.mxu0 0.0
    %380 = vmatpush.msra.mxu0 0.0
    %381 = vmatpush.msra.mxu0 0.0
    %382 = vmatpush.msra.mxu0 0.0
    %383 = vmatpush.msra.mxu0 0.0
    %384 = vmatpush.msra.mxu0 0.0
    %385 = vmatpush.msra.mxu0 0.0
    %386 = vmatpush.msra.mxu0 0.0
    %387 = vmatpush.msra.mxu0 %v173
    %388 = vmatpush.msra.mxu0 %v171
    %389 = vmatpush.msra.mxu0 %v169
    %390 = vmatpush.msra.mxu0 %v167
    %391 = vmatpush.msra.mxu0 %v165
    %392 = vmatpush.msra.mxu0 %v163
    %393 = vmatpush.msra.mxu0 %v161
    %394 = vmatpush.msra.mxu0 %v159
    %395 = vmatmul.f32.gmra.mxu0 %v377
    %v396 = vpop.f32.mrf.mxu0
    %v397 = vadd.f32 0.0, %v396
    %398 = vdwg.mxu0
    %399 = vmatpush.msra.mxu0 0.0
    %400 = vmatpush.msra.mxu0 0.0
    %401 = vmatpush.msra.mxu0 0.0
    %402 = vmatpush.msra.mxu0 0.0
    %403 = vmatpush.msra.mxu0 0.0
    %404 = vmatpush.msra.mxu0 0.0
    %405 = vmatpush.msra.mxu0 0.0
    %406 = vmatpush.msra.mxu0 0.0
    %407 = vmatpush.msra.mxu0 %v174
    %408 = vmatpush.msra.mxu0 %v172
    %409 = vmatpush.msra.mxu0 %v170
    %410 = vmatpush.msra.mxu0 %v168
    %411 = vmatpush.msra.mxu0 %v166
    %412 = vmatpush.msra.mxu0 %v164
    %413 = vmatpush.msra.mxu0 %v162
    %414 = vmatpush.msra.mxu0 %v160
    %415 = vmatmul.f32.gmra.mxu0 %v377
    %v416 = vpop.f32.mrf.mxu0
    %v417 = vadd.f32 0.0, %v416
    %418 = vdwg.mxu0
    %v421 = vrot.slane %v397, 4
    %v422 = vrot.slane %v417, 4
    %v425 = vadd.f32 %v131, %v421
    %v426 = vadd.f32 %v154, %v422
    %v427 = vxor.u32 %v425, 2147483648
    %v428 = vmul.f32 %v427, 1.442695
    %v429 = vpow.pop %v428
    %v430 = vadd.f32 %v429, 1.0
    %v431 = vrcp.pop %v430
    %v432 = vmul.f32 %v430, %v431
    %v433 = vsub.f32 1.0, %v432
    %v434 = vmul.f32 %v431, %v433
    %v435 = vadd.f32 %v431, %v434
    %vm436 = vweird.f32 %v430
    %vm437 = vweird.f32 %v431
    %vm438 = vmor %vm436, %vm437
    %v439 = vsel %vm438, %v431, %v435
    %v440 = vand.u32 2147483647, %v430
    %vm441 = vcmp.eq.f32.partialorder %v440, 8.507059e+37
    %v442 = vand.u32 %v430, 2147483648
    %v443 = vor.u32 1.1754944e-38, %v442
    %v444 = vsel %vm441, %v443, %v439
    %v445 = vmul.f32 1.0, %v444
    %v446 = vtanh.pop %v426
    %v447 = vxor.u32 %v426, 2147483648
    %v448 = vmul.f32 %v447, 1.442695
    %v449 = vpow.pop %v448
    %v450 = vadd.f32 %v449, 1.0
    %v451 = vrcp.pop %v450
    %v452 = vmul.f32 %v450, %v451
    %v453 = vsub.f32 1.0, %v452
    %v454 = vmul.f32 %v451, %v453
    %v455 = vadd.f32 %v451, %v454
    %vm456 = vweird.f32 %v450
    %vm457 = vweird.f32 %v451
    %vm458 = vmor %vm456, %vm457
    %v459 = vsel %vm458, %v451, %v455
    %v460 = vand.u32 2147483647, %v450
    %vm461 = vcmp.eq.f32.partialorder %v460, 8.507059e+37
    %v462 = vand.u32 %v450, 2147483648
    %v463 = vor.u32 1.1754944e-38, %v462
    %v464 = vsel %vm461, %v463, %v459
    %v465 = vmul.f32 1.0, %v464
    %v467 = vrot.slane %v370, 6
    %v469 = vmul.f32 %v445, %v467
    %v470 = vmul.f32 %v445, %v446
    %472 = vrot.lane.b32.xlu0 %v470, 64
    %v473 = vpop.permute.xlu0 %472
    %v475 = vadd.f32 %v469, %v473
    %v476 = vtanh.pop %v475
    %v477 = vmul.f32 %v465, %v476
    %v479 = vrot.slane %v477, 4
    %480 = vrot.lane.b32.xlu0 %v479, 64
    %v481 = vpop.permute.xlu0 %480
    %v482 = vsel %vm175, %v481, 0
    %484 = vmatpush.msra.mxu0 0.0
    %485 = vmatpush.msra.mxu0 0.0
    %486 = vmatpush.msra.mxu0 0.0
    %487 = vmatpush.msra.mxu0 0.0
    %488 = vmatpush.msra.mxu0 0.0
    %489 = vmatpush.msra.mxu0 0.0
    %490 = vmatpush.msra.mxu0 0.0
    %491 = vmatpush.msra.mxu0 0.0
    %492 = vmatpush.msra.mxu0 %v173
    %493 = vmatpush.msra.mxu0 %v171
    %494 = vmatpush.msra.mxu0 %v169
    %495 = vmatpush.msra.mxu0 %v167
    %496 = vmatpush.msra.mxu0 %v165
    %497 = vmatpush.msra.mxu0 %v163
    %498 = vmatpush.msra.mxu0 %v161
    %499 = vmatpush.msra.mxu0 %v159
    %500 = vmatmul.f32.gmra.mxu0 %v482
    %v501 = vpop.f32.mrf.mxu0
    %v502 = vadd.f32 0.0, %v501
    %503 = vdwg.mxu0
    %504 = vmatpush.msra.mxu0 0.0
    %505 = vmatpush.msra.mxu0 0.0
    %506 = vmatpush.msra.mxu0 0.0
    %507 = vmatpush.msra.mxu0 0.0
    %508 = vmatpush.msra.mxu0 0.0
    %509 = vmatpush.msra.mxu0 0.0
    %510 = vmatpush.msra.mxu0 0.0
    %511 = vmatpush.msra.mxu0 0.0
    %512 = vmatpush.msra.mxu0 %v174
    %513 = vmatpush.msra.mxu0 %v172
    %514 = vmatpush.msra.mxu0 %v170
    %515 = vmatpush.msra.mxu0 %v168
    %516 = vmatpush.msra.mxu0 %v166
    %517 = vmatpush.msra.mxu0 %v164
    %518 = vmatpush.msra.mxu0 %v162
    %519 = vmatpush.msra.mxu0 %v160
    %520 = vmatmul.f32.gmra.mxu0 %v482
    %v521 = vpop.f32.mrf.mxu0
    %v522 = vadd.f32 0.0, %v521
    %523 = vdwg.mxu0
    %v526 = vrot.slane %v502, 2
    %v527 = vrot.slane %v522, 2
    %v530 = vadd.f32 %v131, %v526
    %v531 = vadd.f32 %v154, %v527
    %v532 = vxor.u32 %v530, 2147483648
    %v533 = vmul.f32 %v532, 1.442695
    %v534 = vpow.pop %v533
    %v535 = vadd.f32 %v534, 1.0
    %v536 = vrcp.pop %v535
    %v537 = vmul.f32 %v535, %v536
    %v538 = vsub.f32 1.0, %v537
    %v539 = vmul.f32 %v536, %v538
    %v540 = vadd.f32 %v536, %v539
    %vm541 = vweird.f32 %v535
    %vm542 = vweird.f32 %v536
    %vm543 = vmor %vm541, %vm542
    %v544 = vsel %vm543, %v536, %v540
    %v545 = vand.u32 2147483647, %v535
    %vm546 = vcmp.eq.f32.partialorder %v545, 8.507059e+37
    %v547 = vand.u32 %v535, 2147483648
    %v548 = vor.u32 1.1754944e-38, %v547
    %v549 = vsel %vm546, %v548, %v544
    %v550 = vmul.f32 1.0, %v549
    %v551 = vtanh.pop %v531
    %v552 = vxor.u32 %v531, 2147483648
    %v553 = vmul.f32 %v552, 1.442695
    %v554 = vpow.pop %v553
    %v555 = vadd.f32 %v554, 1.0
    %v556 = vrcp.pop %v555
    %v557 = vmul.f32 %v555, %v556
    %v558 = vsub.f32 1.0, %v557
    %v559 = vmul.f32 %v556, %v558
    %v560 = vadd.f32 %v556, %v559
    %vm561 = vweird.f32 %v555
    %vm562 = vweird.f32 %v556
    %vm563 = vmor %vm561, %vm562
    %v564 = vsel %vm563, %v556, %v560
    %v565 = vand.u32 2147483647, %v555
    %vm566 = vcmp.eq.f32.partialorder %v565, 8.507059e+37
    %v567 = vand.u32 %v555, 2147483648
    %v568 = vor.u32 1.1754944e-38, %v567
    %v569 = vsel %vm566, %v568, %v564
    %v570 = vmul.f32 1.0, %v569
    %v572 = vrot.slane %v475, 6
    %v574 = vmul.f32 %v550, %v572
    %v575 = vmul.f32 %v550, %v551
    %577 = vrot.lane.b32.xlu0 %v575, 64
    %v578 = vpop.permute.xlu0 %577
    %v580 = vadd.f32 %v574, %v578
    %v581 = vtanh.pop %v580
    %v582 = vmul.f32 %v570, %v581
    %v584 = vrot.slane %v582, 6
    %585 = vrot.lane.b32.xlu0 %v584, 64
    %v586 = vpop.permute.xlu0 %585
    %v587 = vsel %vm175, %v586, 0
    %589 = vmatpush.msra.mxu0 0.0
    %590 = vmatpush.msra.mxu0 0.0
    %591 = vmatpush.msra.mxu0 0.0
    %592 = vmatpush.msra.mxu0 0.0
    %593 = vmatpush.msra.mxu0 0.0
    %594 = vmatpush.msra.mxu0 0.0
    %595 = vmatpush.msra.mxu0 0.0
    %596 = vmatpush.msra.mxu0 0.0
    %597 = vmatpush.msra.mxu0 %v173
    %598 = vmatpush.msra.mxu0 %v171
    %599 = vmatpush.msra.mxu0 %v169
    %600 = vmatpush.msra.mxu0 %v167
    %601 = vmatpush.msra.mxu0 %v165
    %602 = vmatpush.msra.mxu0 %v163
    %603 = vmatpush.msra.mxu0 %v161
    %604 = vmatpush.msra.mxu0 %v159
    %605 = vmatmul.f32.gmra.mxu0 %v587
    %v606 = vpop.f32.mrf.mxu0
    %v607 = vadd.f32 0.0, %v606
    %608 = vdwg.mxu0
    %609 = vmatpush.msra.mxu0 0.0
    %610 = vmatpush.msra.mxu0 0.0
    %611 = vmatpush.msra.mxu0 0.0
    %612 = vmatpush.msra.mxu0 0.0
    %613 = vmatpush.msra.mxu0 0.0
    %614 = vmatpush.msra.mxu0 0.0
    %615 = vmatpush.msra.mxu0 0.0
    %616 = vmatpush.msra.mxu0 0.0
    %617 = vmatpush.msra.mxu0 %v174
    %618 = vmatpush.msra.mxu0 %v172
    %619 = vmatpush.msra.mxu0 %v170
    %620 = vmatpush.msra.mxu0 %v168
    %621 = vmatpush.msra.mxu0 %v166
    %622 = vmatpush.msra.mxu0 %v164
    %623 = vmatpush.msra.mxu0 %v162
    %624 = vmatpush.msra.mxu0 %v160
    %625 = vmatmul.f32.gmra.mxu0 %v587
    %v626 = vpop.f32.mrf.mxu0
    %v627 = vadd.f32 0.0, %v626
    %628 = vdwg.mxu0
    %v629 = vadd.f32 %v134, %v607
    %v630 = vadd.f32 %v157, %v627
    %v631 = vxor.u32 %v629, 2147483648
    %v632 = vmul.f32 %v631, 1.442695
    %v633 = vpow.pop %v632
    %v634 = vadd.f32 %v633, 1.0
    %v635 = vrcp.pop %v634
    %v636 = vmul.f32 %v634, %v635
    %v637 = vsub.f32 1.0, %v636
    %v638 = vmul.f32 %v635, %v637
    %v639 = vadd.f32 %v635, %v638
    %vm640 = vweird.f32 %v634
    %vm641 = vweird.f32 %v635
    %vm642 = vmor %vm640, %vm641
    %v643 = vsel %vm642, %v635, %v639
    %v644 = vand.u32 2147483647, %v634
    %vm645 = vcmp.eq.f32.partialorder %v644, 8.507059e+37
    %v646 = vand.u32 %v634, 2147483648
    %v647 = vor.u32 1.1754944e-38, %v646
    %v648 = vsel %vm645, %v647, %v643
    %v649 = vmul.f32 1.0, %v648
    %v650 = vtanh.pop %v630
    %v651 = vxor.u32 %v630, 2147483648
    %v652 = vmul.f32 %v651, 1.442695
    %v653 = vpow.pop %v652
    %v654 = vadd.f32 %v653, 1.0
    %v655 = vrcp.pop %v654
    %v656 = vmul.f32 %v654, %v655
    %v657 = vsub.f32 1.0, %v656
    %v658 = vmul.f32 %v655, %v657
    %v659 = vadd.f32 %v655, %v658
    %vm660 = vweird.f32 %v654
    %vm661 = vweird.f32 %v655
    %vm662 = vmor %vm660, %vm661
    %v663 = vsel %vm662, %v655, %v659
    %v664 = vand.u32 2147483647, %v654
    %vm665 = vcmp.eq.f32.partialorder %v664, 8.507059e+37
    %v666 = vand.u32 %v654, 2147483648
    %v667 = vor.u32 1.1754944e-38, %v666
    %v668 = vsel %vm665, %v667, %v663
    %v669 = vmul.f32 1.0, %v668
    %v671 = vrot.slane %v580, 6
    %v673 = vmul.f32 %v649, %v671
    %v674 = vmul.f32 %v649, %v650
    %676 = vrot.lane.b32.xlu0 %v674, 64
    %v677 = vpop.permute.xlu0 %676
    %v679 = vadd.f32 %v673, %v677
    %v680 = vtanh.pop %v679
    %v681 = vmul.f32 %v669, %v680
    %683 = vrot.lane.b32.xlu0 %v681, 64
    %v684 = vpop.permute.xlu0 %683
    %v685 = vsel %vm175, %v684, 0
    %687 = vmatpush.msra.mxu0 0.0
    %688 = vmatpush.msra.mxu0 0.0
    %689 = vmatpush.msra.mxu0 0.0
    %690 = vmatpush.msra.mxu0 0.0
    %691 = vmatpush.msra.mxu0 0.0
    %692 = vmatpush.msra.mxu0 0.0
    %693 = vmatpush.msra.mxu0 0.0
    %694 = vmatpush.msra.mxu0 0.0
    %695 = vmatpush.msra.mxu0 %v173
    %696 = vmatpush.msra.mxu0 %v171
    %697 = vmatpush.msra.mxu0 %v169
    %698 = vmatpush.msra.mxu0 %v167
    %699 = vmatpush.msra.mxu0 %v165
    %700 = vmatpush.msra.mxu0 %v163
    %701 = vmatpush.msra.mxu0 %v161
    %702 = vmatpush.msra.mxu0 %v159
    %703 = vmatmul.f32.gmra.mxu0 %v685
    %v704 = vpop.f32.mrf.mxu0
    %v705 = vadd.f32 0.0, %v704
    %706 = vdwg.mxu0
    %707 = vmatpush.msra.mxu0 0.0
    %708 = vmatpush.msra.mxu0 0.0
    %709 = vmatpush.msra.mxu0 0.0
    %710 = vmatpush.msra.mxu0 0.0
    %711 = vmatpush.msra.mxu0 0.0
    %712 = vmatpush.msra.mxu0 0.0
    %713 = vmatpush.msra.mxu0 0.0
    %714 = vmatpush.msra.mxu0 0.0
    %715 = vmatpush.msra.mxu0 %v174
    %716 = vmatpush.msra.mxu0 %v172
    %717 = vmatpush.msra.mxu0 %v170
    %718 = vmatpush.msra.mxu0 %v168
    %719 = vmatpush.msra.mxu0 %v166
    %720 = vmatpush.msra.mxu0 %v164
    %721 = vmatpush.msra.mxu0 %v162
    %722 = vmatpush.msra.mxu0 %v160
    %723 = vmatmul.f32.gmra.mxu0 %v685
    %v724 = vpop.f32.mrf.mxu0
    %v725 = vadd.f32 0.0, %v724
    %726 = vdwg.mxu0
    %v729 = vrot.slane %v705, 6
    %v730 = vrot.slane %v725, 6
    %v733 = vadd.f32 %v134, %v729
    %v734 = vadd.f32 %v157, %v730
    %v735 = vxor.u32 %v733, 2147483648
    %v736 = vmul.f32 %v735, 1.442695
    %v737 = vpow.pop %v736
    %v738 = vadd.f32 %v737, 1.0
    %v739 = vrcp.pop %v738
    %v740 = vmul.f32 %v738, %v739
    %v741 = vsub.f32 1.0, %v740
    %v742 = vmul.f32 %v739, %v741
    %v743 = vadd.f32 %v739, %v742
    %vm744 = vweird.f32 %v738
    %vm745 = vweird.f32 %v739
    %vm746 = vmor %vm744, %vm745
    %v747 = vsel %vm746, %v739, %v743
    %v748 = vand.u32 2147483647, %v738
    %vm749 = vcmp.eq.f32.partialorder %v748, 8.507059e+37
    %v750 = vand.u32 %v738, 2147483648
    %v751 = vor.u32 1.1754944e-38, %v750
    %v752 = vsel %vm749, %v751, %v747
    %v753 = vmul.f32 1.0, %v752
    %v754 = vtanh.pop %v734
    %v755 = vxor.u32 %v734, 2147483648
    %v756 = vmul.f32 %v755, 1.442695
    %v757 = vpow.pop %v756
    %v758 = vadd.f32 %v757, 1.0
    %v759 = vrcp.pop %v758
    %v760 = vmul.f32 %v758, %v759
    %v761 = vsub.f32 1.0, %v760
    %v762 = vmul.f32 %v759, %v761
    %v763 = vadd.f32 %v759, %v762
    %vm764 = vweird.f32 %v758
    %vm765 = vweird.f32 %v759
    %vm766 = vmor %vm764, %vm765
    %v767 = vsel %vm766, %v759, %v763
    %v768 = vand.u32 2147483647, %v758
    %vm769 = vcmp.eq.f32.partialorder %v768, 8.507059e+37
    %v770 = vand.u32 %v758, 2147483648
    %v771 = vor.u32 1.1754944e-38, %v770
    %v772 = vsel %vm769, %v771, %v767
    %v773 = vmul.f32 1.0, %v772
    %v775 = vrot.slane %v679, 6
    %v777 = vmul.f32 %v753, %v775
    %v778 = vmul.f32 %v753, %v754
    %780 = vrot.lane.b32.xlu0 %v778, 64
    %v781 = vpop.permute.xlu0 %780
    %v783 = vadd.f32 %v777, %v781
    %v784 = vtanh.pop %v783
    %v785 = vmul.f32 %v773, %v784
    %v787 = vrot.slane %v785, 2
    %788 = vrot.lane.b32.xlu0 %v787, 64
    %v789 = vpop.permute.xlu0 %788
    %v790 = vsel %vm175, %v789, 0
    %792 = vmatpush.msra.mxu0 0.0
    %793 = vmatpush.msra.mxu0 0.0
    %794 = vmatpush.msra.mxu0 0.0
    %795 = vmatpush.msra.mxu0 0.0
    %796 = vmatpush.msra.mxu0 0.0
    %797 = vmatpush.msra.mxu0 0.0
    %798 = vmatpush.msra.mxu0 0.0
    %799 = vmatpush.msra.mxu0 0.0
    %800 = vmatpush.msra.mxu0 %v173
    %801 = vmatpush.msra.mxu0 %v171
    %802 = vmatpush.msra.mxu0 %v169
    %803 = vmatpush.msra.mxu0 %v167
    %804 = vmatpush.msra.mxu0 %v165
    %805 = vmatpush.msra.mxu0 %v163
    %806 = vmatpush.msra.mxu0 %v161
    %807 = vmatpush.msra.mxu0 %v159
    %808 = vmatmul.f32.gmra.mxu0 %v790
    %v809 = vpop.f32.mrf.mxu0
    %v810 = vadd.f32 0.0, %v809
    %811 = vdwg.mxu0
    %812 = vmatpush.msra.mxu0 0.0
    %813 = vmatpush.msra.mxu0 0.0
    %814 = vmatpush.msra.mxu0 0.0
    %815 = vmatpush.msra.mxu0 0.0
    %816 = vmatpush.msra.mxu0 0.0
    %817 = vmatpush.msra.mxu0 0.0
    %818 = vmatpush.msra.mxu0 0.0
    %819 = vmatpush.msra.mxu0 0.0
    %820 = vmatpush.msra.mxu0 %v174
    %821 = vmatpush.msra.mxu0 %v172
    %822 = vmatpush.msra.mxu0 %v170
    %823 = vmatpush.msra.mxu0 %v168
    %824 = vmatpush.msra.mxu0 %v166
    %825 = vmatpush.msra.mxu0 %v164
    %826 = vmatpush.msra.mxu0 %v162
    %827 = vmatpush.msra.mxu0 %v160
    %828 = vmatmul.f32.gmra.mxu0 %v790
    %v829 = vpop.f32.mrf.mxu0
    %v830 = vadd.f32 0.0, %v829
    %831 = vdwg.mxu0
    %v834 = vrot.slane %v810, 4
    %v835 = vrot.slane %v830, 4
    %v838 = vadd.f32 %v134, %v834
    %v839 = vadd.f32 %v157, %v835
    %v840 = vxor.u32 %v838, 2147483648
    %v841 = vmul.f32 %v840, 1.442695
    %v842 = vpow.pop %v841
    %v843 = vadd.f32 %v842, 1.0
    %v844 = vrcp.pop %v843
    %v845 = vmul.f32 %v843, %v844
    %v846 = vsub.f32 1.0, %v845
    %v847 = vmul.f32 %v844, %v846
    %v848 = vadd.f32 %v844, %v847
    %vm849 = vweird.f32 %v843
    %vm850 = vweird.f32 %v844
    %vm851 = vmor %vm849, %vm850
    %v852 = vsel %vm851, %v844, %v848
    %v853 = vand.u32 2147483647, %v843
    %vm854 = vcmp.eq.f32.partialorder %v853, 8.507059e+37
    %v855 = vand.u32 %v843, 2147483648
    %v856 = vor.u32 1.1754944e-38, %v855
    %v857 = vsel %vm854, %v856, %v852
    %v858 = vmul.f32 1.0, %v857
    %v859 = vtanh.pop %v839
    %v860 = vxor.u32 %v839, 2147483648
    %v861 = vmul.f32 %v860, 1.442695
    %v862 = vpow.pop %v861
    %v863 = vadd.f32 %v862, 1.0
    %v864 = vrcp.pop %v863
    %v865 = vmul.f32 %v863, %v864
    %v866 = vsub.f32 1.0, %v865
    %v867 = vmul.f32 %v864, %v866
    %v868 = vadd.f32 %v864, %v867
    %vm869 = vweird.f32 %v863
    %vm870 = vweird.f32 %v864
    %vm871 = vmor %vm869, %vm870
    %v872 = vsel %vm871, %v864, %v868
    %v873 = vand.u32 2147483647, %v863
    %vm874 = vcmp.eq.f32.partialorder %v873, 8.507059e+37
    %v875 = vand.u32 %v863, 2147483648
    %v876 = vor.u32 1.1754944e-38, %v875
    %v877 = vsel %vm874, %v876, %v872
    %v878 = vmul.f32 1.0, %v877
    %v880 = vrot.slane %v783, 6
    %v882 = vmul.f32 %v858, %v880
    %v883 = vmul.f32 %v858, %v859
    %885 = vrot.lane.b32.xlu0 %v883, 64
    %v886 = vpop.permute.xlu0 %885
    %v888 = vadd.f32 %v882, %v886
    %v889 = vtanh.pop %v888
    %v890 = vmul.f32 %v878, %v889
    %v892 = vrot.slane %v890, 4
    %893 = vrot.lane.b32.xlu0 %v892, 64
    %v894 = vpop.permute.xlu0 %893
    %v895 = vsel %vm175, %v894, 0
    %897 = vmatpush.msra.mxu0 0.0
    %898 = vmatpush.msra.mxu0 0.0
    %899 = vmatpush.msra.mxu0 0.0
    %900 = vmatpush.msra.mxu0 0.0
    %901 = vmatpush.msra.mxu0 0.0
    %902 = vmatpush.msra.mxu0 0.0
    %903 = vmatpush.msra.mxu0 0.0
    %904 = vmatpush.msra.mxu0 0.0
    %905 = vmatpush.msra.mxu0 %v173
    %906 = vmatpush.msra.mxu0 %v171
    %907 = vmatpush.msra.mxu0 %v169
    %908 = vmatpush.msra.mxu0 %v167
    %909 = vmatpush.msra.mxu0 %v165
    %910 = vmatpush.msra.mxu0 %v163
    %911 = vmatpush.msra.mxu0 %v161
    %912 = vmatpush.msra.mxu0 %v159
    %913 = vmatmul.f32.gmra.mxu0 %v895
    %v914 = vpop.f32.mrf.mxu0
    %v915 = vadd.f32 0.0, %v914
    %916 = vdwg.mxu0
    %917 = vmatpush.msra.mxu0 0.0
    %918 = vmatpush.msra.mxu0 0.0
    %919 = vmatpush.msra.mxu0 0.0
    %920 = vmatpush.msra.mxu0 0.0
    %921 = vmatpush.msra.mxu0 0.0
    %922 = vmatpush.msra.mxu0 0.0
    %923 = vmatpush.msra.mxu0 0.0
    %924 = vmatpush.msra.mxu0 0.0
    %925 = vmatpush.msra.mxu0 %v174
    %926 = vmatpush.msra.mxu0 %v172
    %927 = vmatpush.msra.mxu0 %v170
    %928 = vmatpush.msra.mxu0 %v168
    %929 = vmatpush.msra.mxu0 %v166
    %930 = vmatpush.msra.mxu0 %v164
    %931 = vmatpush.msra.mxu0 %v162
    %932 = vmatpush.msra.mxu0 %v160
    %933 = vmatmul.f32.gmra.mxu0 %v895
    %v934 = vpop.f32.mrf.mxu0
    %v935 = vadd.f32 0.0, %v934
    %936 = vdwg.mxu0
    %v939 = vrot.slane %v915, 2
    %v940 = vrot.slane %v935, 2
    %v943 = vadd.f32 %v134, %v939
    %v944 = vadd.f32 %v157, %v940
    %v945 = vxor.u32 %v943, 2147483648
    %v946 = vmul.f32 %v945, 1.442695
    %v947 = vpow.pop %v946
    %v948 = vadd.f32 %v947, 1.0
    %v949 = vrcp.pop %v948
    %v950 = vmul.f32 %v948, %v949
    %v951 = vsub.f32 1.0, %v950
    %v952 = vmul.f32 %v949, %v951
    %v953 = vadd.f32 %v949, %v952
    %vm954 = vweird.f32 %v948
    %vm955 = vweird.f32 %v949
    %vm956 = vmor %vm954, %vm955
    %v957 = vsel %vm956, %v949, %v953
    %v958 = vand.u32 2147483647, %v948
    %vm959 = vcmp.eq.f32.partialorder %v958, 8.507059e+37
    %v960 = vand.u32 %v948, 2147483648
    %v961 = vor.u32 1.1754944e-38, %v960
    %v962 = vsel %vm959, %v961, %v957
    %v963 = vmul.f32 1.0, %v962
    %v964 = vtanh.pop %v944
    %v965 = vxor.u32 %v944, 2147483648
    %v966 = vmul.f32 %v965, 1.442695
    %v967 = vpow.pop %v966
    %v968 = vadd.f32 %v967, 1.0
    %v969 = vrcp.pop %v968
    %v970 = vmul.f32 %v968, %v969
    %v971 = vsub.f32 1.0, %v970
    %v972 = vmul.f32 %v969, %v971
    %v973 = vadd.f32 %v969, %v972
    %vm974 = vweird.f32 %v968
    %vm975 = vweird.f32 %v969
    %vm976 = vmor %vm974, %vm975
    %v977 = vsel %vm976, %v969, %v973
    %v978 = vand.u32 2147483647, %v968
    %vm979 = vcmp.eq.f32.partialorder %v978, 8.507059e+37
    %v980 = vand.u32 %v968, 2147483648
    %v981 = vor.u32 1.1754944e-38, %v980
    %v982 = vsel %vm979, %v981, %v977
    %v983 = vmul.f32 1.0, %v982
    %v985 = vrot.slane %v888, 6
    %v987 = vmul.f32 %v963, %v985
    %v988 = vmul.f32 %v963, %v964
    %990 = vrot.lane.b32.xlu0 %v988, 64
    %v991 = vpop.permute.xlu0 %990
    %v993 = vadd.f32 %v987, %v991
    %v994 = vtanh.pop %v993
    %v995 = vmul.f32 %v983, %v994
    %v996 = vld [vmem:[#allocation8] sm:$0xff]
    %v997 = vld [vmem:[#allocation8 + $0x8] sm:$0xff]
    %v998 = vld [vmem:[#allocation8 + $0x10] sm:$0xff]
    %v999 = vld [vmem:[#allocation8 + $0x18] sm:$0xff]
    %v1000 = vld [vmem:[#allocation8 + $0x20] sm:$0xff]
    %v1001 = vld [vmem:[#allocation8 + $0x28] sm:$0xff]
    %v1002 = vld [vmem:[#allocation8 + $0x30] sm:$0xff]
    %v1003 = vld [vmem:[#allocation8 + $0x38] sm:$0xff]
    %v1004 = vld [vmem:[%s5] sm:$0x1]
    %v1006 = vperm.slane %v1004, 0
    %v1009 = vrot.slane %v995, 6
    %1010 = vrot.lane.b32.xlu0 %v1009, 64
    %v1011 = vpop.permute.xlu0 %1010
    %v1012 = vsel %vm175, %v1011, 0
    %1014 = vmatpush.msra.mxu0 0.0
    %1015 = vmatpush.msra.mxu0 0.0
    %1016 = vmatpush.msra.mxu0 0.0
    %1017 = vmatpush.msra.mxu0 0.0
    %1018 = vmatpush.msra.mxu0 0.0
    %1019 = vmatpush.msra.mxu0 0.0
    %1020 = vmatpush.msra.mxu0 0.0
    %1021 = vmatpush.msra.mxu0 0.0
    %1022 = vmatpush.msra.mxu0 %v1003
    %1023 = vmatpush.msra.mxu0 %v1002
    %1024 = vmatpush.msra.mxu0 %v1001
    %1025 = vmatpush.msra.mxu0 %v1000
    %1026 = vmatpush.msra.mxu0 %v999
    %1027 = vmatpush.msra.mxu0 %v998
    %1028 = vmatpush.msra.mxu0 %v997
    %1029 = vmatpush.msra.mxu0 %v996
    %1030 = vmatmul.f32.gmra.mxu0 %v1012
    %v1031 = vpop.f32.mrf.mxu0
    %v1032 = vadd.f32 %v1006, %v1031
    %1033 = vdwg.mxu0
    %1034 = vst [vmem:[#allocation10] sm:$0x3] %v1032
    // Predicated region
    $region42: #{tpu_custom_call.1} parent=1 // pred_check
      _
    $region43: #{tpu_custom_call.1} parent=1 // pred_check_branch
      %1036 = sbr.rel (0) target = $region45
    $region44: #{tpu_custom_call.1} parent=1 // pred_region
      %1038 = vsyncadd [#allocation4], 0
      %s1040 = sshll.u32 [#allocation10], 4
      %s1041 = int_to_ptr.vmem [resolvable:$true] %s1040
      %s1042 = sshll.u32 %s6, 4
      %s1043 = int_to_ptr.hbm [resolvable:$true] %s1042
      %1045 = dma.vmem_to_hbm [thread:$0]  %s1041, 32, %s1043, [#allocation4]
    $region45: #{tpu_custom_call.1} parent=1 // pred_fallthru
      _
    // Predicated region
    $region46: #{tpu_custom_call.1} parent=1 // pred_check
      _
    $region47: #{tpu_custom_call.1} parent=1 // pred_check_branch
      %1047 = sbr.rel (0) target = $region49
    $region48: #{tpu_custom_call.1} parent=1 // pred_region
      %1049 = dma.done [#allocation4], 32
    $region49: #{tpu_custom_call.1} parent=1 // pred_fallthru
      _
    %1050 = vsyncpa [#allocation3], 1
    %1051 = vsyncpa [#allocation6], 1
    %1052 = vsyncpa [#allocation9], 1
    %1053 = vsyncpa [#allocation4], 1

</llo_original>
